<compile_context>
chip_gen: v7x
topology: tpu7x:2x2x1
jax: 0.10.0
libtpu: 0.0.40
codegen_flags: <defaults>
</compile_context>

<pallas_src>
import functools

import jax
import jax.numpy as jnp
import numpy as np
from jax import lax
from jax.experimental import pallas as pl
from jax.experimental.pallas import tpu as pltpu

EPS = 1e-5


# ---------------------------------------------------------------------------
# In-kernel helpers (all channel-major: arrays are (C, H*W))
# ---------------------------------------------------------------------------
def _shift_flat(x, s, hw):
    """out[:, p] = x[:, p + s] when 0 <= p + s < hw, else 0 (static shift s)."""
    c = x.shape[0]
    if s == 0:
        return x
    if s > 0:
        return jnp.concatenate([x[:, s:], jnp.zeros((c, s), x.dtype)], axis=1)
    return jnp.concatenate([jnp.zeros((c, -s), x.dtype), x[:, :hw + s]], axis=1)


def _patches_cm(x_bf, col_masks, H, W):
    """Build the (9*C, H*W) bf16 patch matrix for a 3x3 / stride-1 / pad-1 conv
    from a channel-major bf16 image (C, H*W).

    Tap (dy, dx) of the output pixel p=(h, w) samples input pixel
    (h+dy-1, w+dx-1), i.e. flat index p + (dy-1)*W + (dx-1).  Out-of-image rows
    fall outside [0, H*W) and are zeroed by the shift; out-of-image columns
    (row-boundary bleed) are zeroed by the precomputed 0/1 column masks."""
    hw = H * W
    taps = []
    for dy in range(3):
        for dx in range(3):
            t = _shift_flat(x_bf, (dy - 1) * W + (dx - 1), hw)
            if dx == 0:
                t = t * col_masks[0:1, :]          # needs w-1 >= 0
            elif dx == 2:
                t = t * col_masks[1:2, :]          # needs w+1 <  W
            taps.append(t)
    return jnp.concatenate(taps, axis=0)           # (9*C, H*W) bf16


def _partial_stats_cm(acc):
    """Per-image (sum, sum-of-squares) over pixels from the f32 accumulator
    (C, H*W) -> (C, 2)."""
    return jnp.concatenate(
        [jnp.sum(acc, axis=1, keepdims=True),
         jnp.sum(acc * acc, axis=1, keepdims=True)], axis=1)


def _conv3x3_cm(x_bf, w_ref, col_masks, H, W):
    """(Cout, 9C) x (9C, H*W) bf16 MXU matmul, f32 accumulation -> (Cout, H*W)."""
    patches = _patches_cm(x_bf, col_masks, H, W)
    return jnp.dot(w_ref[...], patches, preferred_element_type=jnp.float32)


# ---------------------------------------------------------------------------
# Pallas kernels (grid = (B,), one image per grid step, everything channel-major)
# ---------------------------------------------------------------------------
def _stage1_proj_kernel(x_ref, masks_ref, w1_ref, wsc_ref,
                        y1_ref, st1_ref, sc_ref, stsc_ref, *, H, W):
    """conv1 raw (+BN1 stats) and fused 1x1 projection shortcut raw (+stats)."""
    x_bf = x_ref[0].astype(jnp.bfloat16)                     # (Cin, H*W)
    masks = masks_ref[...]                                   # (2, H*W) bf16
    acc1 = _conv3x3_cm(x_bf, w1_ref, masks, H, W)            # (Cout, H*W) f32
    st1_ref[0] = _partial_stats_cm(acc1)                     # stats from f32 acc
    y1_ref[0] = acc1.astype(jnp.bfloat16)                    # lane-dense bf16 store

    sc = jnp.dot(wsc_ref[...], x_bf, preferred_element_type=jnp.float32)
    stsc_ref[0] = _partial_stats_cm(sc)
    sc_ref[0] = sc.astype(jnp.bfloat16)


def _stage1_id_kernel(x_ref, masks_ref, w1_ref, y1_ref, st1_ref, *, H, W):
    """conv1 raw (+BN1 stats); identity shortcut handled in the tail kernel."""
    x_bf = x_ref[0].astype(jnp.bfloat16)
    acc1 = _conv3x3_cm(x_bf, w1_ref, masks_ref[...], H, W)
    st1_ref[0] = _partial_stats_cm(acc1)
    y1_ref[0] = acc1.astype(jnp.bfloat16)


def _mid_kernel(y1_ref, ss1_ref, masks_ref, w2_ref, y2_ref, st2_ref, *, H, W):
    """BN1(scale/shift)+ReLU -> conv2 raw (+BN2 stats).  BN math in f32."""
    y1 = jnp.maximum(
        y1_ref[0].astype(jnp.float32) * ss1_ref[:, 0:1] + ss1_ref[:, 1:2], 0.0)
    acc2 = _conv3x3_cm(y1.astype(jnp.bfloat16), w2_ref, masks_ref[...], H, W)
    st2_ref[0] = _partial_stats_cm(acc2)
    y2_ref[0] = acc2.astype(jnp.bfloat16)


def _tail_proj_kernel(y2_ref, ss2_ref, sc_ref, sssc_ref, o_ref):
    """BN2 + BN_sc + add + ReLU -> lane-dense (Cout, H*W) f32 (== NCHW-flat)."""
    y2 = y2_ref[0].astype(jnp.float32) * ss2_ref[:, 0:1] + ss2_ref[:, 1:2]
    sc = sc_ref[0].astype(jnp.float32) * sssc_ref[:, 0:1] + sssc_ref[:, 1:2]
    o_ref[0] = jnp.maximum(y2 + sc, 0.0)


def _tail_id_kernel(y2_ref, ss2_ref, x_ref, o_ref):
    """BN2 + identity shortcut + ReLU."""
    y2 = y2_ref[0].astype(jnp.float32) * ss2_ref[:, 0:1] + ss2_ref[:, 1:2]
    o_ref[0] = jnp.maximum(y2 + x_ref[0], 0.0)


# ---------------------------------------------------------------------------
# BN finalize (tiny, per-channel, plain JAX).  One-pass E[x^2]-E[x]^2 variance:
# adequate for this tolerance, Welford/two-pass would be tighter if ever needed.
# ---------------------------------------------------------------------------
def _bn_scale_shift(stats, n, gamma, beta):
    """stats: (B, C, 2) per-image [sum, sumsq] -> (C, 2) [scale, shift] f32."""
    tot = jnp.sum(stats, axis=0)                          # (C, 2)
    mean = tot[:, 0] / n
    var = jnp.maximum(tot[:, 1] / n - mean * mean, 0.0)   # biased variance
    scale = gamma.reshape(-1) * lax.rsqrt(var + EPS)
    shift = beta.reshape(-1) - mean * scale
    return jnp.stack([scale, shift], axis=1).astype(jnp.float32)


def _make_col_masks(H, W):
    """(2, H*W) 0/1 masks: row 0 = 'w-1 valid' (dx=0), row 1 = 'w+1 valid' (dx=2)."""
    w_idx = np.tile(np.arange(W), H)
    left = (w_idx >= 1).astype(np.float32)
    right = (w_idx <= W - 2).astype(np.float32)
    return np.stack([left, right], axis=0)


# ---------------------------------------------------------------------------
# Forward wrapper
# ---------------------------------------------------------------------------
def block1_forward(x_nchw, params):
    """Forward pass of Block1 (stride=1).

    params: w1 (3,3,Cin,Cout) HWIO, g1,b1 (1,Cout), w2 (3,3,Cout,Cout),
            g2,b2 (1,Cout), and optionally wsc (Cin,Cout), gsc,bsc (1,Cout)
            for the projection shortcut.
    """
    x = jnp.asarray(x_nchw, jnp.float32)
    B, Cin, H, W = x.shape
    HW = H * W
    w1 = jnp.asarray(params["w1"], jnp.float32)
    Cout = w1.shape[-1]
    n = B * HW
    has_sc = params.get("wsc") is not None

    # NCHW flattening is free and already channel-major; no XLA transpose.
    x_cm = x.reshape(B, Cin, HW)
    col_masks = jnp.asarray(_make_col_masks(H, W), jnp.bfloat16)      # (2, HW)

    # Weights reshaped to channel-major matmul form (tiny, host-side).
    w1k = jnp.transpose(w1, (3, 0, 1, 2)).reshape(Cout, 9 * Cin).astype(jnp.bfloat16)
    w2k = jnp.transpose(jnp.asarray(params["w2"], jnp.float32),
                        (3, 0, 1, 2)).reshape(Cout, 9 * Cout).astype(jnp.bfloat16)

    cparams = pltpu.CompilerParams(
        dimension_semantics=("parallel",),       # batch axis split across cores
        vmem_limit_bytes=48 * 1024 * 1024)       # safe on v5e/v6e/v7x at these tiles

    x_spec = pl.BlockSpec((1, Cin, HW), lambda b: (b, 0, 0))
    act_spec = pl.BlockSpec((1, Cout, HW), lambda b: (b, 0, 0))   # lane-dense tiles
    st_spec = pl.BlockSpec((1, Cout, 2), lambda b: (b, 0, 0))

    def full(shape):
        return pl.BlockSpec(shape, lambda b: tuple(0 for _ in shape))

    act_bf16 = jax.ShapeDtypeStruct((B, Cout, HW), jnp.bfloat16)
    st_f32 = jax.ShapeDtypeStruct((B, Cout, 2), jnp.float32)

    # ---- stage 1: conv1 raw + BN1 stats (+ fused projection shortcut) --------
    if has_sc:
        wsck = jnp.transpose(jnp.asarray(params["wsc"], jnp.float32)).astype(jnp.bfloat16)
        y1_raw, st1, sc_raw, stsc = pl.pallas_call(
            functools.partial(_stage1_proj_kernel, H=H, W=W),
            grid=(B,),
            in_specs=[x_spec, full((2, HW)), full((Cout, 9 * Cin)), full((Cout, Cin))],
            out_specs=(act_spec, st_spec, act_spec, st_spec),
            out_shape=(act_bf16, st_f32, act_bf16, st_f32),
            compiler_params=cparams,
        )(x_cm, col_masks, w1k, wsck)
    else:
        y1_raw, st1 = pl.pallas_call(
            functools.partial(_stage1_id_kernel, H=H, W=W),
            grid=(B,),
            in_specs=[x_spec, full((2, HW)), full((Cout, 9 * Cin))],
            out_specs=(act_spec, st_spec),
            out_shape=(act_bf16, st_f32),
            compiler_params=cparams,
        )(x_cm, col_masks, w1k)

    ss1 = _bn_scale_shift(st1, n, params["g1"], params["b1"])         # (Cout, 2)

    # ---- stage 2: BN1+ReLU -> conv2 raw + BN2 stats ---------------------------
    y2_raw, st2 = pl.pallas_call(
        functools.partial(_mid_kernel, H=H, W=W),
        grid=(B,),
        in_specs=[act_spec, full((Cout, 2)), full((2, HW)), full((Cout, 9 * Cout))],
        out_specs=(act_spec, st_spec),
        out_shape=(act_bf16, st_f32),
        compiler_params=cparams,
    )(y1_raw, ss1, col_masks, w2k)

    ss2 = _bn_scale_shift(st2, n, params["g2"], params["b2"])

    # ---- stage 3: BN2 + shortcut + ReLU, output already NCHW(-flat) -----------
    if has_sc:
        sssc = _bn_scale_shift(stsc, n, params["gsc"], params["bsc"])
        out_cm = pl.pallas_call(
            _tail_proj_kernel,
            grid=(B,),
            in_specs=[act_spec, full((Cout, 2)), act_spec, full((Cout, 2))],
            out_specs=act_spec,
            out_shape=jax.ShapeDtypeStruct((B, Cout, HW), jnp.float32),
            compiler_params=cparams,
        )(y2_raw, ss2, sc_raw, sssc)
    else:
        out_cm = pl.pallas_call(
            _tail_id_kernel,
            grid=(B,),
            in_specs=[act_spec, full((Cout, 2)), act_spec],
            out_specs=act_spec,
            out_shape=jax.ShapeDtypeStruct((B, Cout, HW), jnp.float32),
            compiler_params=cparams,
        )(y2_raw, ss2, x_cm)

    return out_cm.reshape(B, Cout, H, W)         # free reshape: already NCHW order


# ---------------------------------------------------------------------------
# Pure-JAX f32 reference (training-mode BN, matching the PyTorch module)
# ---------------------------------------------------------------------------
def _ref_forward(x_nchw, params):
    x = jnp.transpose(x_nchw, (0, 2, 3, 1)).astype(jnp.float32)

    def conv3x3(v, w):
        return lax.conv_general_dilated(
            v, w, (1, 1), "SAME", dimension_numbers=("NHWC", "HWIO", "NHWC"))

    def bn(y, g, b):
        mean = y.mean(axis=(0, 1, 2), keepdims=True)
        var = ((y - mean) ** 2).mean(axis=(0, 1, 2), keepdims=True)
        return (y - mean) / jnp.sqrt(var + EPS) * g.reshape(1, 1, 1, -1) \
            + b.reshape(1, 1, 1, -1)

    y = jax.nn.relu(bn(conv3x3(x, params["w1"]), params["g1"], params["b1"]))
    y = bn(conv3x3(y, params["w2"]), params["g2"], params["b2"])
    if params.get("wsc") is not None:
        sc = bn(jnp.einsum("bhwc,co->bhwo", x, params["wsc"]),
                params["gsc"], params["bsc"])
    else:
        sc = x
    return jnp.transpose(jax.nn.relu(y + sc), (0, 3, 1, 2))


# ---------------------------------------------------------------------------
# Deterministic parameter init + demo
# ---------------------------------------------------------------------------
def _init_params(key, in_planes, planes):
    ks = jax.random.split(key, 9)
    p = {
        "w1": 0.1 * jax.random.normal(ks[0], (3, 3, in_planes, planes), jnp.float32),
        "g1": 1.0 + 0.1 * jax.random.normal(ks[1], (1, planes), jnp.float32),
        "b1": 0.1 * jax.random.normal(ks[2], (1, planes), jnp.float32),
        "w2": 0.1 * jax.random.normal(ks[3], (3, 3, planes, planes), jnp.float32),
        "g2": 1.0 + 0.1 * jax.random.normal(ks[4], (1, planes), jnp.float32),
        "b2": 0.1 * jax.random.normal(ks[5], (1, planes), jnp.float32),
    }
    if in_planes != planes:     # projection shortcut (stride=1, channel change)
        p["wsc"] = 0.1 * jax.random.normal(ks[6], (in_planes, planes), jnp.float32)
        p["gsc"] = 1.0 + 0.1 * jax.random.normal(ks[7], (1, planes), jnp.float32)
        p["bsc"] = 0.1 * jax.random.normal(ks[8], (1, planes), jnp.float32)
    else:
        p["wsc"] = None
    return p


if __name__ == "__main__":
    key = jax.random.PRNGKey(0)
    k_x1, k_p1, k_x2, k_p2 = jax.random.split(key, 4)

    # bf16 MXU operands / bf16 staged intermediates vs f32 reference.
    RTOL = ATOL = 5e-2

    # Case 1: projection shortcut (in_planes != planes)
    B, Cin, H, W, planes = 2, 4, 16, 16, 8
    x1 = jax.random.normal(k_x1, (B, Cin, H, W), jnp.float32)
    p1 = _init_params(k_p1, Cin, planes)
    out1 = jax.block_until_ready(block1_forward(x1, p1))
    ref1 = jax.block_until_ready(_ref_forward(x1, p1))
    assert out1.shape == (B, planes, H, W)
    np.testing.assert_allclose(np.asarray(out1), np.asarray(ref1), rtol=RTOL, atol=ATOL)

    # Case 2: identity shortcut (in_planes == planes)
    x2 = jax.random.normal(k_x2, (B, planes, H, W), jnp.float32)
    p2 = _init_params(k_p2, planes, planes)
    out2 = jax.block_until_ready(block1_forward(x2, p2))
    ref2 = jax.block_until_ready(_ref_forward(x2, p2))
    assert out2.shape == (B, planes, H, W)
    np.testing.assert_allclose(np.asarray(out2), np.asarray(ref2), rtol=RTOL, atol=ATOL)

    print("KERNEL_OK")
</pallas_src>

<mosaic_0001>
module attributes {stable_mosaic.version = 11 : i64} {
  func.func @_stage1_proj_kernel(%arg0: i32, %arg1: memref<1x4x256xf32, #tpu.memory_space<vmem>>, %arg2: memref<2x256xbf16, #tpu.memory_space<vmem>>, %arg3: memref<8x36xbf16, #tpu.memory_space<vmem>>, %arg4: memref<8x4xbf16, #tpu.memory_space<vmem>>, %arg5: memref<1x8x256xbf16, #tpu.memory_space<vmem>>, %arg6: memref<1x8x2xf32, #tpu.memory_space<vmem>>, %arg7: memref<1x8x256xbf16, #tpu.memory_space<vmem>>, %arg8: memref<1x8x2xf32, #tpu.memory_space<vmem>>) attributes {dimension_semantics = [#tpu.dimension_semantics<parallel>], iteration_bounds = array<i64: 2>, scalar_prefetch = 0 : i64, scratch_operands = 0 : i64, tpu.core_type = #tpu.core_type<tc>, window_params = [{transform_indices = @transform_0, window_bounds = array<i64: 1, 4, 256>}, {pipeline_mode = #tpu.pipeline_mode<synchronous>, transform_indices = @transform_1, window_bounds = array<i64: 2, 256>}, {pipeline_mode = #tpu.pipeline_mode<synchronous>, transform_indices = @transform_2, window_bounds = array<i64: 8, 36>}, {pipeline_mode = #tpu.pipeline_mode<synchronous>, transform_indices = @transform_3, window_bounds = array<i64: 8, 4>}, {transform_indices = @transform_4, window_bounds = array<i64: 1, 8, 256>}, {transform_indices = @transform_5, window_bounds = array<i64: 1, 8, 2>}, {transform_indices = @transform_6, window_bounds = array<i64: 1, 8, 256>}, {transform_indices = @transform_7, window_bounds = array<i64: 1, 8, 2>}]} {
    %c0 = arith.constant 0 : index
    %c0_0 = arith.constant 0 : index
    %c0_1 = arith.constant 0 : index
    %0 = vector.load %arg1[%c0, %c0_0, %c0_1] : memref<1x4x256xf32, #tpu.memory_space<vmem>>, vector<1x4x256xf32>
    %1 = vector.shape_cast %0 : vector<1x4x256xf32> to vector<4x256xf32>
    %2 = arith.truncf %1 : vector<4x256xf32> to vector<4x256xbf16>
    %c0_2 = arith.constant 0 : index
    %c0_3 = arith.constant 0 : index
    %3 = vector.load %arg2[%c0_2, %c0_3] : memref<2x256xbf16, #tpu.memory_space<vmem>>, vector<2x256xbf16>
    %cst = arith.constant 0.000000e+00 : bf16
    %4 = vector.broadcast %cst : bf16 to vector<4x17xbf16>
    %5 = vector.extract_strided_slice %2 {offsets = [0, 0], sizes = [4, 239], strides = [1, 1]} : vector<4x256xbf16> to vector<4x239xbf16>
    %6 = tpu.concatenate %4, %5 in 1 : vector<4x17xbf16>, vector<4x239xbf16> -> vector<4x256xbf16>
    %7 = vector.extract_strided_slice %3 {offsets = [0, 0], sizes = [1, 256], strides = [1, 1]} : vector<2x256xbf16> to vector<1x256xbf16>
    %8 = vector.broadcast %7 : vector<1x256xbf16> to vector<4x256xbf16>
    %9 = arith.mulf %6, %8 : vector<4x256xbf16>
    %cst_4 = arith.constant 0.000000e+00 : bf16
    %10 = vector.broadcast %cst_4 : bf16 to vector<4x16xbf16>
    %11 = vector.extract_strided_slice %2 {offsets = [0, 0], sizes = [4, 240], strides = [1, 1]} : vector<4x256xbf16> to vector<4x240xbf16>
    %12 = tpu.concatenate %10, %11 in 1 : vector<4x16xbf16>, vector<4x240xbf16> -> vector<4x256xbf16>
    %cst_5 = arith.constant 0.000000e+00 : bf16
    %13 = vector.broadcast %cst_5 : bf16 to vector<4x15xbf16>
    %14 = vector.extract_strided_slice %2 {offsets = [0, 0], sizes = [4, 241], strides = [1, 1]} : vector<4x256xbf16> to vector<4x241xbf16>
    %15 = tpu.concatenate %13, %14 in 1 : vector<4x15xbf16>, vector<4x241xbf16> -> vector<4x256xbf16>
    %16 = vector.extract_strided_slice %3 {offsets = [1, 0], sizes = [1, 256], strides = [1, 1]} : vector<2x256xbf16> to vector<1x256xbf16>
    %17 = vector.broadcast %16 : vector<1x256xbf16> to vector<4x256xbf16>
    %18 = arith.mulf %15, %17 : vector<4x256xbf16>
    %cst_6 = arith.constant 0.000000e+00 : bf16
    %19 = vector.broadcast %cst_6 : bf16 to vector<4x1xbf16>
    %20 = vector.extract_strided_slice %2 {offsets = [0, 0], sizes = [4, 255], strides = [1, 1]} : vector<4x256xbf16> to vector<4x255xbf16>
    %21 = tpu.concatenate %19, %20 in 1 : vector<4x1xbf16>, vector<4x255xbf16> -> vector<4x256xbf16>
    %22 = vector.extract_strided_slice %3 {offsets = [0, 0], sizes = [1, 256], strides = [1, 1]} : vector<2x256xbf16> to vector<1x256xbf16>
    %23 = vector.broadcast %22 : vector<1x256xbf16> to vector<4x256xbf16>
    %24 = arith.mulf %21, %23 : vector<4x256xbf16>
    %25 = vector.extract_strided_slice %2 {offsets = [0, 1], sizes = [4, 255], strides = [1, 1]} : vector<4x256xbf16> to vector<4x255xbf16>
    %cst_7 = arith.constant 0.000000e+00 : bf16
    %26 = vector.broadcast %cst_7 : bf16 to vector<4x1xbf16>
    %27 = tpu.concatenate %25, %26 in 1 : vector<4x255xbf16>, vector<4x1xbf16> -> vector<4x256xbf16>
    %28 = vector.extract_strided_slice %3 {offsets = [1, 0], sizes = [1, 256], strides = [1, 1]} : vector<2x256xbf16> to vector<1x256xbf16>
    %29 = vector.broadcast %28 : vector<1x256xbf16> to vector<4x256xbf16>
    %30 = arith.mulf %27, %29 : vector<4x256xbf16>
    %31 = vector.extract_strided_slice %2 {offsets = [0, 15], sizes = [4, 241], strides = [1, 1]} : vector<4x256xbf16> to vector<4x241xbf16>
    %cst_8 = arith.constant 0.000000e+00 : bf16
    %32 = vector.broadcast %cst_8 : bf16 to vector<4x15xbf16>
    %33 = tpu.concatenate %31, %32 in 1 : vector<4x241xbf16>, vector<4x15xbf16> -> vector<4x256xbf16>
    %34 = vector.extract_strided_slice %3 {offsets = [0, 0], sizes = [1, 256], strides = [1, 1]} : vector<2x256xbf16> to vector<1x256xbf16>
    %35 = vector.broadcast %34 : vector<1x256xbf16> to vector<4x256xbf16>
    %36 = arith.mulf %33, %35 : vector<4x256xbf16>
    %37 = vector.extract_strided_slice %2 {offsets = [0, 16], sizes = [4, 240], strides = [1, 1]} : vector<4x256xbf16> to vector<4x240xbf16>
    %cst_9 = arith.constant 0.000000e+00 : bf16
    %38 = vector.broadcast %cst_9 : bf16 to vector<4x16xbf16>
    %39 = tpu.concatenate %37, %38 in 1 : vector<4x240xbf16>, vector<4x16xbf16> -> vector<4x256xbf16>
    %40 = vector.extract_strided_slice %2 {offsets = [0, 17], sizes = [4, 239], strides = [1, 1]} : vector<4x256xbf16> to vector<4x239xbf16>
    %cst_10 = arith.constant 0.000000e+00 : bf16
    %41 = vector.broadcast %cst_10 : bf16 to vector<4x17xbf16>
    %42 = tpu.concatenate %40, %41 in 1 : vector<4x239xbf16>, vector<4x17xbf16> -> vector<4x256xbf16>
    %43 = vector.extract_strided_slice %3 {offsets = [1, 0], sizes = [1, 256], strides = [1, 1]} : vector<2x256xbf16> to vector<1x256xbf16>
    %44 = vector.broadcast %43 : vector<1x256xbf16> to vector<4x256xbf16>
    %45 = arith.mulf %42, %44 : vector<4x256xbf16>
    %46 = tpu.concatenate %9, %12, %18, %24, %2, %30, %36, %39, %45 in 0 : vector<4x256xbf16>, vector<4x256xbf16>, vector<4x256xbf16>, vector<4x256xbf16>, vector<4x256xbf16>, vector<4x256xbf16>, vector<4x256xbf16>, vector<4x256xbf16>, vector<4x256xbf16> -> vector<36x256xbf16>
    %c0_11 = arith.constant 0 : index
    %c0_12 = arith.constant 0 : index
    %47 = vector.load %arg3[%c0_11, %c0_12] : memref<8x36xbf16, #tpu.memory_space<vmem>>, vector<8x36xbf16>
    %cst_13 = arith.constant dense<0.000000e+00> : vector<8x256xf32>
    %48 = tpu.matmul %47, %46, %cst_13 {dimension_numbers = #tpu.dot_dimension_numbers<[1], [0], [0], [1], [0, 0, 1, 1], [], []>} : vector<8x36xbf16>, vector<36x256xbf16>, vector<8x256xf32> -> vector<8x256xf32>
    %cst_14 = arith.constant dense<0.000000e+00> : vector<8xf32>
    %49 = vector.multi_reduction <add>, %48, %cst_14 [1] : vector<8x256xf32> to vector<8xf32>
    %50 = vector.shape_cast %49 : vector<8xf32> to vector<8x1xf32>
    %51 = arith.mulf %48, %48 : vector<8x256xf32>
    %cst_15 = arith.constant dense<0.000000e+00> : vector<8xf32>
    %52 = vector.multi_reduction <add>, %51, %cst_15 [1] : vector<8x256xf32> to vector<8xf32>
    %53 = vector.shape_cast %52 : vector<8xf32> to vector<8x1xf32>
    %54 = tpu.concatenate %50, %53 in 1 : vector<8x1xf32>, vector<8x1xf32> -> vector<8x2xf32>
    %c0_16 = arith.constant 0 : index
    %c0_17 = arith.constant 0 : index
    %c0_18 = arith.constant 0 : index
    %55 = vector.load %arg6[%c0_16, %c0_17, %c0_18] : memref<1x8x2xf32, #tpu.memory_space<vmem>>, vector<1x8x2xf32>
    %56 = vector.shape_cast %55 : vector<1x8x2xf32> to vector<8x2xf32>
    %57 = vector.shape_cast %54 : vector<8x2xf32> to vector<1x8x2xf32>
    tpu.vector_store %arg6[%c0_16, %c0_17, %c0_18], %57 {strides = array<i32>} : memref<1x8x2xf32, #tpu.memory_space<vmem>>, vector<1x8x2xf32>,
    %58 = arith.truncf %48 : vector<8x256xf32> to vector<8x256xbf16>
    %c0_19 = arith.constant 0 : index
    %c0_20 = arith.constant 0 : index
    %c0_21 = arith.constant 0 : index
    %59 = vector.load %arg5[%c0_19, %c0_20, %c0_21] : memref<1x8x256xbf16, #tpu.memory_space<vmem>>, vector<1x8x256xbf16>
    %60 = vector.shape_cast %59 : vector<1x8x256xbf16> to vector<8x256xbf16>
    %61 = vector.shape_cast %58 : vector<8x256xbf16> to vector<1x8x256xbf16>
    tpu.vector_store %arg5[%c0_19, %c0_20, %c0_21], %61 {strides = array<i32>} : memref<1x8x256xbf16, #tpu.memory_space<vmem>>, vector<1x8x256xbf16>,
    %c0_22 = arith.constant 0 : index
    %c0_23 = arith.constant 0 : index
    %62 = vector.load %arg4[%c0_22, %c0_23] : memref<8x4xbf16, #tpu.memory_space<vmem>>, vector<8x4xbf16>
    %cst_24 = arith.constant dense<0.000000e+00> : vector<8x256xf32>
    %63 = tpu.matmul %62, %2, %cst_24 {dimension_numbers = #tpu.dot_dimension_numbers<[1], [0], [0], [1], [0, 0, 1, 1], [], []>} : vector<8x4xbf16>, vector<4x256xbf16>, vector<8x256xf32> -> vector<8x256xf32>
    %cst_25 = arith.constant dense<0.000000e+00> : vector<8xf32>
    %64 = vector.multi_reduction <add>, %63, %cst_25 [1] : vector<8x256xf32> to vector<8xf32>
    %65 = vector.shape_cast %64 : vector<8xf32> to vector<8x1xf32>
    %66 = arith.mulf %63, %63 : vector<8x256xf32>
    %cst_26 = arith.constant dense<0.000000e+00> : vector<8xf32>
    %67 = vector.multi_reduction <add>, %66, %cst_26 [1] : vector<8x256xf32> to vector<8xf32>
    %68 = vector.shape_cast %67 : vector<8xf32> to vector<8x1xf32>
    %69 = tpu.concatenate %65, %68 in 1 : vector<8x1xf32>, vector<8x1xf32> -> vector<8x2xf32>
    %c0_27 = arith.constant 0 : index
    %c0_28 = arith.constant 0 : index
    %c0_29 = arith.constant 0 : index
    %70 = vector.load %arg8[%c0_27, %c0_28, %c0_29] : memref<1x8x2xf32, #tpu.memory_space<vmem>>, vector<1x8x2xf32>
    %71 = vector.shape_cast %70 : vector<1x8x2xf32> to vector<8x2xf32>
    %72 = vector.shape_cast %69 : vector<8x2xf32> to vector<1x8x2xf32>
    tpu.vector_store %arg8[%c0_27, %c0_28, %c0_29], %72 {strides = array<i32>} : memref<1x8x2xf32, #tpu.memory_space<vmem>>, vector<1x8x2xf32>,
    %73 = arith.truncf %63 : vector<8x256xf32> to vector<8x256xbf16>
    %c0_30 = arith.constant 0 : index
    %c0_31 = arith.constant 0 : index
    %c0_32 = arith.constant 0 : index
    %74 = vector.load %arg7[%c0_30, %c0_31, %c0_32] : memref<1x8x256xbf16, #tpu.memory_space<vmem>>, vector<1x8x256xbf16>
    %75 = vector.shape_cast %74 : vector<1x8x256xbf16> to vector<8x256xbf16>
    %76 = vector.shape_cast %73 : vector<8x256xbf16> to vector<1x8x256xbf16>
    tpu.vector_store %arg7[%c0_30, %c0_31, %c0_32], %76 {strides = array<i32>} : memref<1x8x256xbf16, #tpu.memory_space<vmem>>, vector<1x8x256xbf16>,
    return
  }
  func.func @transform_0(%arg0: i32) -> (i32, i32, i32) {
    %c0_i32 = arith.constant 0 : i32
    %c0_i32_0 = arith.constant 0 : i32
    %c0_i32_1 = arith.constant 0 : i32
    return %arg0, %c0_i32, %c0_i32_0 : i32, i32, i32
  }
  func.func @transform_1(%arg0: i32) -> (i32, i32) {
    %c0_i32 = arith.constant 0 : i32
    %c0_i32_0 = arith.constant 0 : i32
    %c0_i32_1 = arith.constant 0 : i32
    return %c0_i32, %c0_i32_0 : i32, i32
  }
  func.func @transform_2(%arg0: i32) -> (i32, i32) {
    %c0_i32 = arith.constant 0 : i32
    %c0_i32_0 = arith.constant 0 : i32
    %c0_i32_1 = arith.constant 0 : i32
    return %c0_i32, %c0_i32_0 : i32, i32
  }
  func.func @transform_3(%arg0: i32) -> (i32, i32) {
    %c0_i32 = arith.constant 0 : i32
    %c0_i32_0 = arith.constant 0 : i32
    %c0_i32_1 = arith.constant 0 : i32
    return %c0_i32, %c0_i32_0 : i32, i32
  }
  func.func @transform_4(%arg0: i32) -> (i32, i32, i32) {
    %c0_i32 = arith.constant 0 : i32
    %c0_i32_0 = arith.constant 0 : i32
    %c0_i32_1 = arith.constant 0 : i32
    return %arg0, %c0_i32, %c0_i32_0 : i32, i32, i32
  }
  func.func @transform_5(%arg0: i32) -> (i32, i32, i32) {
    %c0_i32 = arith.constant 0 : i32
    %c0_i32_0 = arith.constant 0 : i32
    %c0_i32_1 = arith.constant 0 : i32
    return %arg0, %c0_i32, %c0_i32_0 : i32, i32, i32
  }
  func.func @transform_6(%arg0: i32) -> (i32, i32, i32) {
    %c0_i32 = arith.constant 0 : i32
    %c0_i32_0 = arith.constant 0 : i32
    %c0_i32_1 = arith.constant 0 : i32
    return %arg0, %c0_i32, %c0_i32_0 : i32, i32, i32
  }
  func.func @transform_7(%arg0: i32) -> (i32, i32, i32) {
    %c0_i32 = arith.constant 0 : i32
    %c0_i32_0 = arith.constant 0 : i32
    %c0_i32_1 = arith.constant 0 : i32
    return %arg0, %c0_i32, %c0_i32_0 : i32, i32, i32
  }
}

</mosaic_0001>

<llo_original>
// kernel: tpu_custom_call.1
$region0: #{tpu_custom_call.1}
  #allocation0 [shape = 'u32[]', space=smem, size = 0x4, offset = 0x4, fixed_abs, tag = 'smem constant byte address 0x4 - core index']
  #allocation1 [shape = 'u32[144,128]{1,0:T(1,128)}', space=vmem, size = 0x12000, scoped, tag = 'internal scratch']
  %s0 = inlined_call_operand.hbm [shape: f32[2,4,256], index: 0, kind: input, shape index: {}]
  %s1 = inlined_call_operand.vmem [shape: bf16[2,256], index: 1, kind: input, shape index: {}]
  %s2 = inlined_call_operand.vmem [shape: bf16[8,36], index: 2, kind: input, shape index: {}]
  %s3 = inlined_call_operand.vmem [shape: bf16[8,4], index: 3, kind: input, shape index: {}]
  %s4 = inlined_call_operand.hbm [shape: bf16[2,8,256], index: 4, kind: output, shape index: {0}]
  %s5 = inlined_call_operand.vmem [shape: f32[2,8,2], index: 5, kind: output, shape index: {1}]
  %s6 = inlined_call_operand.hbm [shape: bf16[2,8,256], index: 6, kind: output, shape index: {2}]
  %s7 = inlined_call_operand.vmem [shape: f32[2,8,2], index: 7, kind: output, shape index: {3}]
  %8 = xla_tuple %s4, %s5, %s6, %s7
  %s9 = sld [smem:[#allocation0]]
  $region77: #{tpu_custom_call.1} parent=0
    _
  %s11 = ssub.s32 1, %s9
  %s12 = scalar_select 0, %s11, %s9
  $region1: #{tpu_custom_call.1} parent=0
    #allocation2 [shape = 'u8[8192]{0}', space=vmem, size = 0x2000, scoped, tag = 'input window, operand 0']
    #allocation3 [shape = 's32[2]{0}', space=sflag, size = 0x8, scoped, tag = 'scoped memory for tpu_custom_call.1']
    #allocation4 [shape = 's32[2]{0}', space=sflag, size = 0x8, scoped, tag = 'scoped memory for tpu_custom_call.1']
    #allocation5 [shape = 'u8[8192]{0}', space=vmem, size = 0x2000, scoped, tag = 'output window, operand 0']
    #allocation6 [shape = 'u8[8192]{0}', space=vmem, size = 0x2000, scoped, tag = 'output window, operand 2']
    #allocation7 [shape = 's32[2]{0}', space=sflag, size = 0x8, scoped, tag = 'scoped memory for tpu_custom_call.1']
    %13 = vsyncpa [#allocation3], 0
    %s14 = scalar_lea.sflag [#allocation3], 1
    %15 = vsyncpa %s14, 0
    %16 = vsyncpa [#allocation4], 0
    %s17 = scalar_lea.sflag [#allocation4], 1
    %18 = vsyncpa %s17, 0
    %19 = vsyncpa [#allocation7], 0
    %s20 = scalar_lea.sflag [#allocation7], 1
    %21 = vsyncpa %s20, 0
    loop: start=0, step=1, limit=4
    $region2: #{tpu_custom_call.1} parent=1 // loop_pre_header
      _
    $region3: #{tpu_custom_call.1} parent=1 // loop_header
      %s23 = sphi 0, %s27
      %p24 = scmp.ge.s32.totalorder %s23, 4
      %s33 = sphi 0, %s35
      %s36 = sphi 0, %s33
      %s37 = sphi 0, %s36
      %s53 = sphi 0, %s37
      %s57 = sphi 0, %s57
      %s59 = sphi 0, %s57
      %s60 = sphi 0, %s59
      %s74 = sphi 0, %s60
      %s78 = sphi 0, %s78
      %s80 = sphi 0, %s78
      %s81 = sphi 0, %s80
      %s95 = sphi 0, %s81
      %s99 = sphi 0, %s99
      %s101 = sphi 0, %s99
      %s102 = sphi 0, %s101
      %s116 = sphi 0, %s102
      %s122 = sphi 0, %s124
      %s125 = sphi 0, %s122
      %s126 = sphi 0, %s125
      %s142 = sphi 0, %s126
      %s148 = sphi 0, %s150
      %s151 = sphi 0, %s148
      %s152 = sphi 0, %s151
      %s168 = sphi 0, %s152
      %s174 = sphi 0, %s176
      %s177 = sphi 0, %s174
      %s178 = sphi 0, %s177
      %s194 = sphi 0, %s178
      %s200 = sphi 0, %s202
      %s203 = sphi 0, %s200
      %s204 = sphi 0, %s203
      %s220 = sphi 0, %s204
    $region4: #{tpu_custom_call.1} parent=1 // loop_header_branch
      %26 = sbr.rel (%p24) target = $region8
    $region5: #{tpu_custom_call.1} parent=1 // loop_body
      %s28 = ssub.s32 %s23, 1
      %s29 = ssub.s32 %s23, 2
      %s30 = sadd.s32 %s23, 1
      %s31 = ssub.s32 %s23, %s30
      %p32 = scmp.eq.s32.totalorder %s31, 0
      %s34 = sadd.s32 %s33, 1
      %s35 = scalar_select %p32, %s33, %s34
      %p38 = pneg %p32
      %p39 = scmp.eq.s32.totalorder %s23, 1
      %p40 = por %p38, %p39
      %p41 = scmp.ne.s32.totalorder %s33, %s36
      %p42 = scmp.eq.s32.totalorder %s23, 0
      %p43 = por %p41, %p42
      %p44 = scmp.ne.s32.totalorder %s33, %s36
      %p45 = scmp.eq.s32.totalorder %s28, 1
      %p46 = por %p44, %p45
      %p47 = scmp.ne.s32.totalorder %s36, %s37
      %p48 = scmp.eq.s32.totalorder %s28, 0
      %p49 = por %p47, %p48
      %p50 = scmp.ne.s32.totalorder %s36, %s37
      %p51 = scmp.eq.s32.totalorder %s29, 1
      %p52 = por %p50, %p51
      %p54 = scmp.ne.s32.totalorder %s37, %s53
      %p55 = scmp.eq.s32.totalorder %s29, 0
      %p56 = por %p54, %p55
      %s58 = sadd.s32 %s57, 1
      %p61 = scmp.eq.s32.totalorder %s23, 1
      %p62 = scmp.ne.s32.totalorder %s57, %s59
      %p63 = scmp.eq.s32.totalorder %s23, 0
      %p64 = por %p62, %p63
      %p65 = scmp.ne.s32.totalorder %s57, %s59
      %p66 = scmp.eq.s32.totalorder %s28, 1
      %p67 = por %p65, %p66
      %p68 = scmp.ne.s32.totalorder %s59, %s60
      %p69 = scmp.eq.s32.totalorder %s28, 0
      %p70 = por %p68, %p69
      %p71 = scmp.ne.s32.totalorder %s59, %s60
      %p72 = scmp.eq.s32.totalorder %s29, 1
      %p73 = por %p71, %p72
      %p75 = scmp.ne.s32.totalorder %s60, %s74
      %p76 = scmp.eq.s32.totalorder %s29, 0
      %p77 = por %p75, %p76
      %s79 = sadd.s32 %s78, 1
      %p82 = scmp.eq.s32.totalorder %s23, 1
      %p83 = scmp.ne.s32.totalorder %s78, %s80
      %p84 = scmp.eq.s32.totalorder %s23, 0
      %p85 = por %p83, %p84
      %p86 = scmp.ne.s32.totalorder %s78, %s80
      %p87 = scmp.eq.s32.totalorder %s28, 1
      %p88 = por %p86, %p87
      %p89 = scmp.ne.s32.totalorder %s80, %s81
      %p90 = scmp.eq.s32.totalorder %s28, 0
      %p91 = por %p89, %p90
      %p92 = scmp.ne.s32.totalorder %s80, %s81
      %p93 = scmp.eq.s32.totalorder %s29, 1
      %p94 = por %p92, %p93
      %p96 = scmp.ne.s32.totalorder %s81, %s95
      %p97 = scmp.eq.s32.totalorder %s29, 0
      %p98 = por %p96, %p97
      %s100 = sadd.s32 %s99, 1
      %p103 = scmp.eq.s32.totalorder %s23, 1
      %p104 = scmp.ne.s32.totalorder %s99, %s101
      %p105 = scmp.eq.s32.totalorder %s23, 0
      %p106 = por %p104, %p105
      %p107 = scmp.ne.s32.totalorder %s99, %s101
      %p108 = scmp.eq.s32.totalorder %s28, 1
      %p109 = por %p107, %p108
      %p110 = scmp.ne.s32.totalorder %s101, %s102
      %p111 = scmp.eq.s32.totalorder %s28, 0
      %p112 = por %p110, %p111
      %p113 = scmp.ne.s32.totalorder %s101, %s102
      %p114 = scmp.eq.s32.totalorder %s29, 1
      %p115 = por %p113, %p114
      %p117 = scmp.ne.s32.totalorder %s102, %s116
      %p118 = scmp.eq.s32.totalorder %s29, 0
      %p119 = por %p117, %p118
      %s120 = ssub.s32 %s23, %s30
      %p121 = scmp.eq.s32.totalorder %s120, 0
      %s123 = sadd.s32 %s122, 1
      %s124 = scalar_select %p121, %s122, %s123
      %p127 = pneg %p121
      %p128 = scmp.eq.s32.totalorder %s23, 1
      %p129 = por %p127, %p128
      %p130 = scmp.ne.s32.totalorder %s122, %s125
      %p131 = scmp.eq.s32.totalorder %s23, 0
      %p132 = por %p130, %p131
      %p133 = scmp.ne.s32.totalorder %s122, %s125
      %p134 = scmp.eq.s32.totalorder %s28, 1
      %p135 = por %p133, %p134
      %p136 = scmp.ne.s32.totalorder %s125, %s126
      %p137 = scmp.eq.s32.totalorder %s28, 0
      %p138 = por %p136, %p137
      %p139 = scmp.ne.s32.totalorder %s125, %s126
      %p140 = scmp.eq.s32.totalorder %s29, 1
      %p141 = por %p139, %p140
      %p143 = scmp.ne.s32.totalorder %s126, %s142
      %p144 = scmp.eq.s32.totalorder %s29, 0
      %p145 = por %p143, %p144
      %s146 = ssub.s32 %s23, %s30
      %p147 = scmp.eq.s32.totalorder %s146, 0
      %s149 = sadd.s32 %s148, 1
      %s150 = scalar_select %p147, %s148, %s149
      %p153 = pneg %p147
      %p154 = scmp.eq.s32.totalorder %s23, 1
      %p155 = por %p153, %p154
      %p156 = scmp.ne.s32.totalorder %s148, %s151
      %p157 = scmp.eq.s32.totalorder %s23, 0
      %p158 = por %p156, %p157
      %p159 = scmp.ne.s32.totalorder %s148, %s151
      %p160 = scmp.eq.s32.totalorder %s28, 1
      %p161 = por %p159, %p160
      %p162 = scmp.ne.s32.totalorder %s151, %s152
      %p163 = scmp.eq.s32.totalorder %s28, 0
      %p164 = por %p162, %p163
      %p165 = scmp.ne.s32.totalorder %s151, %s152
      %p166 = scmp.eq.s32.totalorder %s29, 1
      %p167 = por %p165, %p166
      %p169 = scmp.ne.s32.totalorder %s152, %s168
      %p170 = scmp.eq.s32.totalorder %s29, 0
      %p171 = por %p169, %p170
      %s172 = ssub.s32 %s23, %s30
      %p173 = scmp.eq.s32.totalorder %s172, 0
      %s175 = sadd.s32 %s174, 1
      %s176 = scalar_select %p173, %s174, %s175
      %p179 = pneg %p173
      %p180 = scmp.eq.s32.totalorder %s23, 1
      %p181 = por %p179, %p180
      %p182 = scmp.ne.s32.totalorder %s174, %s177
      %p183 = scmp.eq.s32.totalorder %s23, 0
      %p184 = por %p182, %p183
      %p185 = scmp.ne.s32.totalorder %s174, %s177
      %p186 = scmp.eq.s32.totalorder %s28, 1
      %p187 = por %p185, %p186
      %p188 = scmp.ne.s32.totalorder %s177, %s178
      %p189 = scmp.eq.s32.totalorder %s28, 0
      %p190 = por %p188, %p189
      %p191 = scmp.ne.s32.totalorder %s177, %s178
      %p192 = scmp.eq.s32.totalorder %s29, 1
      %p193 = por %p191, %p192
      %p195 = scmp.ne.s32.totalorder %s178, %s194
      %p196 = scmp.eq.s32.totalorder %s29, 0
      %p197 = por %p195, %p196
      %s198 = ssub.s32 %s23, %s30
      %p199 = scmp.eq.s32.totalorder %s198, 0
      %s201 = sadd.s32 %s200, 1
      %s202 = scalar_select %p199, %s200, %s201
      %p205 = pneg %p199
      %p206 = scmp.eq.s32.totalorder %s23, 1
      %p207 = por %p205, %p206
      %p208 = scmp.ne.s32.totalorder %s200, %s203
      %p209 = scmp.eq.s32.totalorder %s23, 0
      %p210 = por %p208, %p209
      %p211 = scmp.ne.s32.totalorder %s200, %s203
      %p212 = scmp.eq.s32.totalorder %s28, 1
      %p213 = por %p211, %p212
      %p214 = scmp.ne.s32.totalorder %s203, %s204
      %p215 = scmp.eq.s32.totalorder %s28, 0
      %p216 = por %p214, %p215
      %p217 = scmp.ne.s32.totalorder %s203, %s204
      %p218 = scmp.eq.s32.totalorder %s29, 1
      %p219 = por %p217, %p218
      %p221 = scmp.ne.s32.totalorder %s204, %s220
      %p222 = scmp.eq.s32.totalorder %s29, 0
      %p223 = por %p221, %p222
      %p224 = scmp.le.s32.totalorder 1, %s23
      %p225 = scmp.lt.s32.totalorder %s23, 3
      %p226 = pnand %p224, %p225
      %p227 = pneg %p226
      // Predicated region
      $region9: #{tpu_custom_call.1} parent=5 // pred_check
        _
      $region10: #{tpu_custom_call.1} parent=5 // pred_check_branch
        %229 = sbr.rel (%p226) target = $region12
      $region11: #{tpu_custom_call.1} parent=5 // pred_region
        %s230 = ssub.s32 %s23, 1
        // Predicated region
        $region13: #{tpu_custom_call.1} parent=11 // pred_check
          %p231 = pneg %p70
        $region14: #{tpu_custom_call.1} parent=11 // pred_check_branch
          %233 = sbr.rel (%p231) target = $region16
        $region15: #{tpu_custom_call.1} parent=11 // pred_region
          _
        $region16: #{tpu_custom_call.1} parent=11 // pred_fallthru
          _
        // Predicated region
        $region17: #{tpu_custom_call.1} parent=11 // pred_check
          %p234 = pneg %p91
        $region18: #{tpu_custom_call.1} parent=11 // pred_check_branch
          %236 = sbr.rel (%p234) target = $region20
        $region19: #{tpu_custom_call.1} parent=11 // pred_region
          _
        $region20: #{tpu_custom_call.1} parent=11 // pred_fallthru
          _
        // Predicated region
        $region21: #{tpu_custom_call.1} parent=11 // pred_check
          %p237 = pneg %p112
        $region22: #{tpu_custom_call.1} parent=11 // pred_check_branch
          %239 = sbr.rel (%p237) target = $region24
        $region23: #{tpu_custom_call.1} parent=11 // pred_region
          _
        $region24: #{tpu_custom_call.1} parent=11 // pred_fallthru
          _
      $region12: #{tpu_custom_call.1} parent=5 // pred_fallthru
        _
      %p240 = scmp.lt.s32.totalorder %s23, 2
      // Predicated region
      $region25: #{tpu_custom_call.1} parent=5 // pred_check
        %p241 = pneg %p240
      $region26: #{tpu_custom_call.1} parent=5 // pred_check_branch
        %243 = sbr.rel (%p241) target = $region28
      $region27: #{tpu_custom_call.1} parent=5 // pred_region
        // Predicated region
        $region29: #{tpu_custom_call.1} parent=27 // pred_check
          %p244 = pneg %p43
        $region30: #{tpu_custom_call.1} parent=27 // pred_check_branch
          %246 = sbr.rel (%p244) target = $region32
        $region31: #{tpu_custom_call.1} parent=27 // pred_region
          %s247 = sand.u32 %s33, 1
          %s248 = scalar_lea.sflag [#allocation3], %s247
          %s249 = sand.u32 %s33, 1
          %s250 = smul.addr %s249, 8
          %s251 = scalar_lea.vmem [#allocation2], %s250
          %s253 = ssub.s32 128, 128
          %254 = vsyncadd %s248, %s253
          %s255 = smul.addr %s23, 2
          %s256 = smul.addr %s255, 64
          %s257 = scalar_lea.hbm %s0, %s256
          %s259 = sshll.u32 %s251, 4
          %s260 = int_to_ptr.vmem [resolvable:$true] %s259
          %262 = dma.hbm_to_vmem [thread:$0]  %s257, 128, %s260, %s248
        $region32: #{tpu_custom_call.1} parent=27 // pred_fallthru
          _
      $region28: #{tpu_custom_call.1} parent=5 // pred_fallthru
        _
      %p263 = scmp.le.s32.totalorder 1, %s23
      %p264 = scmp.lt.s32.totalorder %s23, 3
      %p265 = pnand %p263, %p264
      %p266 = pneg %p265
      // Predicated region
      $region33: #{tpu_custom_call.1} parent=5 // pred_check
        _
      $region34: #{tpu_custom_call.1} parent=5 // pred_check_branch
        %268 = sbr.rel (%p265) target = $region36
      $region35: #{tpu_custom_call.1} parent=5 // pred_region
        %s269 = ssub.s32 %s23, 1
        %s270 = sand.u32 %s36, 1
        %s271 = scalar_lea.sflag [#allocation3], %s270
        %s272 = sand.u32 %s36, 1
        %s273 = smul.addr %s272, 8
        %s274 = scalar_lea.vmem [#allocation2], %s273
        // Predicated region
        $region37: #{tpu_custom_call.1} parent=35 // pred_check
          %p275 = pneg %p49
        $region38: #{tpu_custom_call.1} parent=35 // pred_check_branch
          %277 = sbr.rel (%p275) target = $region40
        $region39: #{tpu_custom_call.1} parent=35 // pred_region
          %278 = dma.done %s271, 128
        $region40: #{tpu_custom_call.1} parent=35 // pred_fallthru
          _
        %s279 = sand.u32 %s36, 1
        %s280 = scalar_lea.sflag [#allocation3], %s279
        %s281 = sand.u32 %s36, 1
        %s282 = smul.addr %s281, 8
        %s283 = scalar_lea.vmem [#allocation2], %s282
        %p284 = pneg %p49
        %p285 = pneg %p46
        %p286 = pneg %p70
        %p287 = pneg %p67
        %p288 = pneg %p91
        %p289 = pneg %p88
        %p290 = pneg %p112
        %p291 = pneg %p109
        %p292 = pneg %p138
        %p293 = pneg %p135
        %s294 = sand.u32 %s125, 1
        %s295 = scalar_lea.sflag [#allocation4], %s294
        %s296 = sand.u32 %s125, 1
        %s297 = smul.addr %s296, 8
        %s298 = scalar_lea.vmem [#allocation5], %s297
        %p299 = pneg %p164
        %p300 = pneg %p161
        %p301 = scmp.lt.s32.totalorder %s28, 1
        %s302 = scalar_select %p301, %s28, 1
        %s303 = smul.addr %s302, 8
        %s304 = scalar_lea.vmem %s5, %s303
        %p305 = pneg %p190
        %p306 = pneg %p187
        %s307 = sand.u32 %s177, 1
        %s308 = scalar_lea.sflag [#allocation7], %s307
        %s309 = sand.u32 %s177, 1
        %s310 = smul.addr %s309, 8
        %s311 = scalar_lea.vmem [#allocation6], %s310
        %p312 = pneg %p216
        %p313 = pneg %p213
        %p314 = scmp.lt.s32.totalorder %s28, 1
        %s315 = scalar_select %p314, %s28, 1
        %s316 = smul.addr %s315, 8
        %s317 = scalar_lea.vmem %s7, %s316
        %p318 = scmp.lt.s32.totalorder %s28, 1
        %s319 = scalar_select %p318, %s28, 1
        %s320 = smul.addr %s319, 8
        %s321 = scalar_lea.vmem %s5, %s320
        %p322 = scmp.lt.s32.totalorder %s28, 1
        %s323 = scalar_select %p322, %s28, 1
        %s324 = smul.addr %s323, 8
        %s325 = scalar_lea.vmem %s7, %s324
        %v327 = vld [vmem:[%s274] sm:$0xff]
        %v329 = vcombine.high %v327, %v327
        %v331 = vpack.c.bf16 %v327, %v327
        %v332 = vpack.c.bf16 %v329, %v329
        %v333 = vld [vmem:[%s1] sm:$0x3]
        %336 = vrot.lane.b32.xlu0 %v331, 17
        %v337 = vpop.permute.xlu0 %336
        %338 = vrot.lane.b32.xlu0 %v332, 17
        %v339 = vpop.permute.xlu0 %338
        %vm340 = vcmask 138240
        %v341 = vsel %vm340, %v337, %v339
        %vm343 = vcmask 138240
        %v346 = vsel %vm343, 0, %v337
        %v350 = vunpack.c.l.s4 1966171168
        %v351 = vunpack.c.0.s8 %v350
        %v352 = vlaneseq
        %v353 = vshrl.u32 %v352, 7
        %v354 = vsub.s32 %v351, %v353
        %v355 = vrot.slane %v333, %v354
        %v356 = vcombine.high %v355, %v355
        %v358 = vunpack.c.l.s4 1966171168
        %v359 = vunpack.c.0.s8 %v358
        %v360 = vlaneseq
        %v361 = vshrl.u32 %v360, 7
        %v362 = vsub.s32 %v359, %v361
        %v363 = vrot.slane %v355, %v362
        %v365 = vunpack.c.l.s4 1966171168
        %v366 = vunpack.c.0.s8 %v365
        %v367 = vlaneseq
        %v368 = vshrl.u32 %v367, 7
        %v369 = vsub.s32 %v366, %v368
        %v370 = vrot.slane %v356, %v369
        %v372 = vpack.i.b16 %v363, %v363
        %v374 = vlaneseq
        %v375 = vshrl.u32 %v374, 7
        %v376 = vsub.s32 0, %v375
        %v377 = vrot.slane %v372, %v376
        %v379 = vpack.i.b16 %v370, %v370
        %v381 = vlaneseq
        %v382 = vshrl.u32 %v381, 7
        %v383 = vsub.s32 0, %v382
        %v384 = vrot.slane %v379, %v383
        %v385 = vmul.bf16 %v346, %v377
        %v386 = vmul.bf16 %v341, %v384
        %387 = vrot.lane.b32.xlu0 %v331, 16
        %v388 = vpop.permute.xlu0 %387
        %389 = vrot.lane.b32.xlu0 %v332, 16
        %v390 = vpop.permute.xlu0 %389
        %vm391 = vcmask 130048
        %v392 = vsel %vm391, %v388, %v390
        %vm393 = vcmask 130048
        %v395 = vsel %vm393, 0, %v388
        %396 = vrot.lane.b32.xlu0 %v331, 15
        %v397 = vpop.permute.xlu0 %396
        %398 = vrot.lane.b32.xlu0 %v332, 15
        %v399 = vpop.permute.xlu0 %398
        %vm400 = vcmask 121856
        %v401 = vsel %vm400, %v397, %v399
        %vm403 = vcmask 121856
        %v405 = vsel %vm403, 0, %v397
        %v407 = vshrl.u32 %v363, 16
        %v408 = vpack.i.b16 %v407, %v407
        %v410 = vlaneseq
        %v411 = vshrl.u32 %v410, 7
        %v412 = vsub.s32 0, %v411
        %v413 = vrot.slane %v408, %v412
        %v414 = vshrl.u32 %v370, 16
        %v415 = vpack.i.b16 %v414, %v414
        %v417 = vlaneseq
        %v418 = vshrl.u32 %v417, 7
        %v419 = vsub.s32 0, %v418
        %v420 = vrot.slane %v415, %v419
        %v421 = vmul.bf16 %v405, %v413
        %v422 = vmul.bf16 %v401, %v420
        %423 = vrot.lane.b32.xlu0 %v331, 1
        %v424 = vpop.permute.xlu0 %423
        %425 = vrot.lane.b32.xlu0 %v332, 1
        %v426 = vpop.permute.xlu0 %425
        %vm427 = vcmask 7168
        %v428 = vsel %vm427, %v424, %v426
        %vm430 = vcmask 7168
        %v432 = vsel %vm430, 0, %v424
        %v434 = vmul.bf16 %v432, %v377
        %v435 = vmul.bf16 %v428, %v384
        %436 = vrot.lane.b32.xlu0 %v331, 127
        %v437 = vpop.permute.xlu0 %436
        %438 = vrot.lane.b32.xlu0 %v332, 127
        %v439 = vpop.permute.xlu0 %438
        %vm440 = vcmask 1039360
        %v441 = vsel %vm440, %v437, %v439
        %vm443 = vcmask 1039360
        %v445 = vsel %vm443, %v439, 0
        %v447 = vmul.bf16 %v441, %v413
        %v448 = vmul.bf16 %v445, %v420
        %449 = vrot.lane.b32.xlu0 %v331, 113
        %v450 = vpop.permute.xlu0 %449
        %451 = vrot.lane.b32.xlu0 %v332, 113
        %v452 = vpop.permute.xlu0 %451
        %vm453 = vcmask 924672
        %v454 = vsel %vm453, %v450, %v452
        %vm456 = vcmask 924672
        %v458 = vsel %vm456, %v452, 0
        %v460 = vmul.bf16 %v454, %v377
        %v461 = vmul.bf16 %v458, %v384
        %462 = vrot.lane.b32.xlu0 %v331, 112
        %v463 = vpop.permute.xlu0 %462
        %464 = vrot.lane.b32.xlu0 %v332, 112
        %v465 = vpop.permute.xlu0 %464
        %vm466 = vcmask 916480
        %v467 = vsel %vm466, %v463, %v465
        %vm468 = vcmask 916480
        %v470 = vsel %vm468, %v465, 0
        %471 = vrot.lane.b32.xlu0 %v331, 111
        %v472 = vpop.permute.xlu0 %471
        %473 = vrot.lane.b32.xlu0 %v332, 111
        %v474 = vpop.permute.xlu0 %473
        %vm475 = vcmask 908288
        %v476 = vsel %vm475, %v472, %v474
        %vm478 = vcmask 908288
        %v480 = vsel %vm478, %v474, 0
        %v482 = vmul.bf16 %v476, %v413
        %v483 = vmul.bf16 %v480, %v420
        %v485 = vrot.slane %v395, 6
        %v486 = vrot.slane %v392, 6
        %v489 = vrot.slane %v421, 4
        %v490 = vrot.slane %v422, 4
        %v493 = vrot.slane %v434, 2
        %v494 = vrot.slane %v435, 2
        %v497 = vrot.slane %v447, 6
        %v498 = vrot.slane %v448, 6
        %v501 = vrot.slane %v460, 4
        %v502 = vrot.slane %v461, 4
        %v504 = vrot.slane %v467, 2
        %v505 = vrot.slane %v470, 2
        %vm506 = vcmask 1041408
        %v509 = vsel %vm506, %v385, %v485
        %v512 = vsel %vm506, %v386, %v486
        %vm513 = vcmask 1043456
        %v515 = vsel %vm513, %v509, %v489
        %v517 = vsel %vm513, %v512, %v490
        %vm518 = vcmask 1045504
        %v520 = vsel %vm518, %v515, %v493
        %v523 = vsel %vm518, %v517, %v494
        %v527 = vsel %vm506, %v331, %v497
        %v530 = vsel %vm506, %v332, %v498
        %v532 = vsel %vm513, %v527, %v501
        %v534 = vsel %vm513, %v530, %v502
        %v536 = vsel %vm518, %v532, %v504
        %v539 = vsel %vm518, %v534, %v505
        %v541 = vld [vmem:[%s2] sm:$0xf]
        %vm542 = vcmask 293888
        %v544 = vsel %vm542, %v541, 0
        %v547 = vsel %vm506, %v482, 0
        %v550 = vsel %vm506, %v483, 0
        %552 = vmatprep.subr.bf16.mxu0 %v523
        %553 = vmatpush1.bf16.msra.mxu0 %v520
        %554 = vmatprep.subr.bf16.mxu0 %v539
        %555 = vmatpush1.bf16.msra.mxu0 %v536
        %556 = vmatprep.subr.bf16.mxu0 %v550
        %557 = vmatpush1.bf16.msra.mxu0 %v547
        %558 = vmatprep.subr.bf16.mxu0 0
        %559 = vmatpush1.bf16.msra.mxu0 0
        %560 = vmatprep.subr.bf16.mxu0 0
        %561 = vmatpush1.bf16.msra.mxu0 0
        %562 = vmatprep.subr.bf16.mxu0 0
        %563 = vmatpush1.bf16.msra.mxu0 0
        %564 = vmatprep.subr.bf16.mxu0 0
        %565 = vmatpush1.bf16.msra.mxu0 0
        %566 = vmatprep.subr.bf16.mxu0 0
        %567 = vmatpush1.bf16.msra.mxu0 0
        %568 = vmatprep.subr.bf16.mxu0 0
        %569 = vmatpush1.bf16.msra.mxu0 0
        %570 = vmatprep.subr.bf16.mxu0 0
        %571 = vmatpush1.bf16.msra.mxu0 0
        %572 = vmatprep.subr.bf16.mxu0 0
        %573 = vmatpush1.bf16.msra.mxu0 0
        %574 = vmatprep.subr.bf16.mxu0 0
        %575 = vmatpush1.bf16.msra.mxu0 0
        %576 = vmatprep.subr.bf16.mxu0 0
        %577 = vmatpush1.bf16.msra.mxu0 0
        %578 = vmatprep.subr.bf16.mxu0 0
        %579 = vmatpush1.bf16.msra.mxu0 0
        %580 = vmatprep.subr.bf16.mxu0 0
        %581 = vmatpush1.bf16.msra.mxu0 0
        %582 = vmatprep.subr.bf16.mxu0 0
        %583 = vmatpush1.bf16.msra.mxu0 0
        %584 = vmatprep.mubr.bf16.mxu0 0
        %585 = vmatmul.mubr.bf16.gmra.mrb[0].mxu0 %v544
        %v586 = vpop.f32.mrb[0].mxu0
        %v587 = vadd.f32 0.0, %v586
        %v588 = vpop.f32.mrb[0].mxu0
        %v589 = vadd.f32 0.0, %v588
        %v590 = vpop.f32.mrb[0].mxu0
        %v591 = vpop.f32.mrb[0].mxu0
        %592 = vdwg.mxu0
        %v593 = vadd.f32 %v587, %v589
        %594 = vadd.xlane.f32.xlu0 %v593
        %v595 = vpop.xlane.xlu0 %594
        %v596 = vmul.f32 %v587, %v587
        %v597 = vmul.f32 %v589, %v589
        %v598 = vadd.f32 %v596, %v597
        %599 = vadd.xlane.f32.xlu0 %v598
        %v600 = vpop.xlane.xlu0 %599
        %v601 = vsel %vm430, %v595, %v600
        %vm602 = vcmask 15360
        %603 = vst.msk [vmem:[%s321] sm:$0xff] %vm602, %v601
        %v604 = vpack.c.bf16 %v587, %v587
        %v605 = vpack.c.bf16 %v589, %v589
        %v608 = vunpack.c.l.b16 %v604
        %v609 = vunpack.c.l.b16 %v605
        %v610 = vpack.c.b16 %v609, %v608
        %612 = vst [vmem:[%s298] sm:$0xff] %v610
        %v613 = vld [vmem:[%s3] sm:$0xf]
        %vm614 = vcmask 31744
        %v616 = vsel %vm614, %v613, 0
        %v618 = vsel %vm506, %v331, 0
        %v620 = vsel %vm506, %v332, 0
        %622 = vmatprep.subr.bf16.mxu0 %v620
        %623 = vmatpush1.bf16.msra.mxu0 %v618
        %624 = vmatprep.subr.bf16.mxu0 0
        %625 = vmatpush1.bf16.msra.mxu0 0
        %626 = vmatprep.subr.bf16.mxu0 0
        %627 = vmatpush1.bf16.msra.mxu0 0
        %628 = vmatprep.subr.bf16.mxu0 0
        %629 = vmatpush1.bf16.msra.mxu0 0
        %630 = vmatprep.subr.bf16.mxu0 0
        %631 = vmatpush1.bf16.msra.mxu0 0
        %632 = vmatprep.subr.bf16.mxu0 0
        %633 = vmatpush1.bf16.msra.mxu0 0
        %634 = vmatprep.subr.bf16.mxu0 0
        %635 = vmatpush1.bf16.msra.mxu0 0
        %636 = vmatprep.subr.bf16.mxu0 0
        %637 = vmatpush1.bf16.msra.mxu0 0
        %638 = vmatprep.subr.bf16.mxu0 0
        %639 = vmatpush1.bf16.msra.mxu0 0
        %640 = vmatprep.subr.bf16.mxu0 0
        %641 = vmatpush1.bf16.msra.mxu0 0
        %642 = vmatprep.subr.bf16.mxu0 0
        %643 = vmatpush1.bf16.msra.mxu0 0
        %644 = vmatprep.subr.bf16.mxu0 0
        %645 = vmatpush1.bf16.msra.mxu0 0
        %646 = vmatprep.subr.bf16.mxu0 0
        %647 = vmatpush1.bf16.msra.mxu0 0
        %648 = vmatprep.subr.bf16.mxu0 0
        %649 = vmatpush1.bf16.msra.mxu0 0
        %650 = vmatprep.subr.bf16.mxu0 0
        %651 = vmatpush1.bf16.msra.mxu0 0
        %652 = vmatprep.subr.bf16.mxu0 0
        %653 = vmatpush1.bf16.msra.mxu0 0
        %654 = vmatprep.mubr.bf16.mxu0 0
        %655 = vmatmul.mubr.bf16.gmra.mrb[0].mxu0 %v616
        %v656 = vpop.f32.mrb[0].mxu0
        %v657 = vadd.f32 0.0, %v656
        %v658 = vpop.f32.mrb[0].mxu0
        %v659 = vadd.f32 0.0, %v658
        %v660 = vpop.f32.mrb[0].mxu0
        %v661 = vpop.f32.mrb[0].mxu0
        %662 = vdwg.mxu0
        %v663 = vadd.f32 %v657, %v659
        %664 = vadd.xlane.f32.xlu0 %v663
        %v665 = vpop.xlane.xlu0 %664
        %v666 = vmul.f32 %v657, %v657
        %v667 = vmul.f32 %v659, %v659
        %v668 = vadd.f32 %v666, %v667
        %669 = vadd.xlane.f32.xlu0 %v668
        %v670 = vpop.xlane.xlu0 %669
        %v671 = vsel %vm430, %v665, %v670
        %672 = vst.msk [vmem:[%s325] sm:$0xff] %vm602, %v671
        %v673 = vpack.c.bf16 %v657, %v657
        %v674 = vpack.c.bf16 %v659, %v659
        %v677 = vunpack.c.l.b16 %v673
        %v678 = vunpack.c.l.b16 %v674
        %v679 = vpack.c.b16 %v678, %v677
        %681 = vst [vmem:[%s311] sm:$0xff] %v679
        %s682 = sand.u32 %s125, 1
        %s683 = scalar_lea.sflag [#allocation4], %s682
        %s684 = sand.u32 %s125, 1
        %s685 = smul.addr %s684, 8
        %s686 = scalar_lea.vmem [#allocation5], %s685
        %p687 = scmp.lt.s32.totalorder %s28, 1
        %s688 = scalar_select %p687, %s28, 1
        %s689 = smul.addr %s688, 8
        %s690 = scalar_lea.vmem %s5, %s689
        %s691 = sand.u32 %s177, 1
        %s692 = scalar_lea.sflag [#allocation7], %s691
        %s693 = sand.u32 %s177, 1
        %s694 = smul.addr %s693, 8
        %s695 = scalar_lea.vmem [#allocation6], %s694
        %p696 = scmp.lt.s32.totalorder %s28, 1
        %s697 = scalar_select %p696, %s28, 1
        %s698 = smul.addr %s697, 8
        %s699 = scalar_lea.vmem %s7, %s698
        // Predicated region
        $region41: #{tpu_custom_call.1} parent=35 // pred_check
          %p700 = pneg %p135
        $region42: #{tpu_custom_call.1} parent=35 // pred_check_branch
          %702 = sbr.rel (%p700) target = $region44
        $region43: #{tpu_custom_call.1} parent=35 // pred_region
          %s704 = ssub.s32 128, 128
          %705 = vsyncadd %s683, %s704
          %s706 = smul.addr %s28, 2
          %s707 = smul.addr %s706, 64
          %s708 = scalar_lea.hbm %s4, %s707
          %s710 = sshll.u32 %s686, 4
          %s711 = int_to_ptr.vmem [resolvable:$true] %s710
          %713 = dma.vmem_to_hbm [thread:$0]  %s711, 128, %s708, %s683
        $region44: #{tpu_custom_call.1} parent=35 // pred_fallthru
          _
        // Predicated region
        $region45: #{tpu_custom_call.1} parent=35 // pred_check
          %p714 = pneg %p161
        $region46: #{tpu_custom_call.1} parent=35 // pred_check_branch
          %716 = sbr.rel (%p714) target = $region48
        $region47: #{tpu_custom_call.1} parent=35 // pred_region
          _
        $region48: #{tpu_custom_call.1} parent=35 // pred_fallthru
          _
        // Predicated region
        $region49: #{tpu_custom_call.1} parent=35 // pred_check
          %p717 = pneg %p187
        $region50: #{tpu_custom_call.1} parent=35 // pred_check_branch
          %719 = sbr.rel (%p717) target = $region52
        $region51: #{tpu_custom_call.1} parent=35 // pred_region
          %s721 = ssub.s32 128, 128
          %722 = vsyncadd %s692, %s721
          %s723 = smul.addr %s28, 2
          %s724 = smul.addr %s723, 64
          %s725 = scalar_lea.hbm %s6, %s724
          %s727 = sshll.u32 %s695, 4
          %s728 = int_to_ptr.vmem [resolvable:$true] %s727
          %730 = dma.vmem_to_hbm [thread:$0]  %s728, 128, %s725, %s692
        $region52: #{tpu_custom_call.1} parent=35 // pred_fallthru
          _
        // Predicated region
        $region53: #{tpu_custom_call.1} parent=35 // pred_check
          %p731 = pneg %p213
        $region54: #{tpu_custom_call.1} parent=35 // pred_check_branch
          %733 = sbr.rel (%p731) target = $region56
        $region55: #{tpu_custom_call.1} parent=35 // pred_region
          _
        $region56: #{tpu_custom_call.1} parent=35 // pred_fallthru
          _
      $region36: #{tpu_custom_call.1} parent=5 // pred_fallthru
        _
      %p734 = scmp.le.s32.totalorder 2, %s23
      // Predicated region
      $region57: #{tpu_custom_call.1} parent=5 // pred_check
        %p735 = pneg %p734
      $region58: #{tpu_custom_call.1} parent=5 // pred_check_branch
        %737 = sbr.rel (%p735) target = $region60
      $region59: #{tpu_custom_call.1} parent=5 // pred_region
        %s738 = ssub.s32 %s23, 2
        // Predicated region
        $region61: #{tpu_custom_call.1} parent=59 // pred_check
          %p739 = pneg %p141
        $region62: #{tpu_custom_call.1} parent=59 // pred_check_branch
          %741 = sbr.rel (%p739) target = $region64
        $region63: #{tpu_custom_call.1} parent=59 // pred_region
          %s742 = sand.u32 %s126, 1
          %s743 = scalar_lea.sflag [#allocation4], %s742
          %s744 = sand.u32 %s126, 1
          %s745 = smul.addr %s744, 8
          %s746 = scalar_lea.vmem [#allocation5], %s745
          %747 = dma.done %s743, 128
        $region64: #{tpu_custom_call.1} parent=59 // pred_fallthru
          _
        // Predicated region
        $region65: #{tpu_custom_call.1} parent=59 // pred_check
          %p748 = pneg %p167
        $region66: #{tpu_custom_call.1} parent=59 // pred_check_branch
          %750 = sbr.rel (%p748) target = $region68
        $region67: #{tpu_custom_call.1} parent=59 // pred_region
          %p751 = scmp.lt.s32.totalorder %s29, 1
          %s752 = scalar_select %p751, %s29, 1
          %s753 = smul.addr %s752, 8
          %s754 = scalar_lea.vmem %s5, %s753
        $region68: #{tpu_custom_call.1} parent=59 // pred_fallthru
          _
        // Predicated region
        $region69: #{tpu_custom_call.1} parent=59 // pred_check
          %p755 = pneg %p193
        $region70: #{tpu_custom_call.1} parent=59 // pred_check_branch
          %757 = sbr.rel (%p755) target = $region72
        $region71: #{tpu_custom_call.1} parent=59 // pred_region
          %s758 = sand.u32 %s178, 1
          %s759 = scalar_lea.sflag [#allocation7], %s758
          %s760 = sand.u32 %s178, 1
          %s761 = smul.addr %s760, 8
          %s762 = scalar_lea.vmem [#allocation6], %s761
          %763 = dma.done %s759, 128
        $region72: #{tpu_custom_call.1} parent=59 // pred_fallthru
          _
        // Predicated region
        $region73: #{tpu_custom_call.1} parent=59 // pred_check
          %p764 = pneg %p219
        $region74: #{tpu_custom_call.1} parent=59 // pred_check_branch
          %766 = sbr.rel (%p764) target = $region76
        $region75: #{tpu_custom_call.1} parent=59 // pred_region
          %p767 = scmp.lt.s32.totalorder %s29, 1
          %s768 = scalar_select %p767, %s29, 1
          %s769 = smul.addr %s768, 8
          %s770 = scalar_lea.vmem %s7, %s769
        $region76: #{tpu_custom_call.1} parent=59 // pred_fallthru
          _
      $region60: #{tpu_custom_call.1} parent=5 // pred_fallthru
        _
    $region6: #{tpu_custom_call.1} parent=1 // loop_footer
      %s27 = sadd.s32 1, %s23
    $region7: #{tpu_custom_call.1} parent=1 // loop_footer_branch
      %22 = sbr.rel target = $region3
    $region8: #{tpu_custom_call.1} parent=1 // loop_exit
      _
    %771 = vsyncpa [#allocation3], 1
    %s772 = scalar_lea.sflag [#allocation3], 1
    %773 = vsyncpa %s772, 1
    %774 = vsyncpa [#allocation4], 1
    %s775 = scalar_lea.sflag [#allocation4], 1
    %776 = vsyncpa %s775, 1
    %777 = vsyncpa [#allocation7], 1
    %s778 = scalar_lea.sflag [#allocation7], 1
    %779 = vsyncpa %s778, 1

</llo_original>
